<compile_context>
chip_gen: v7x
topology: tpu7x:2x2x1
jax: 0.10.0
libtpu: 0.0.40
codegen_flags: <defaults>
</compile_context>

<pallas_src>
import functools
import math

import jax
import jax.numpy as jnp
from jax import lax
from jax.experimental import pallas as pl
from jax.experimental.pallas import tpu as pltpu


def _round_up(x, m):
    return ((x + m - 1) // m) * m


def _accumulate_chunk(acc, yc_c, yh_c):
    # acc: [TB, Sp] f32, yc_c: [TB, C] f32, yh_c: [TB, C, Sp] f32
    # Explicit per-row-scalar FMA: live data is the accumulator plus one
    # [TB, Sp] slab; no materialized [TB, D, S] temporary.
    for k in range(yh_c.shape[1]):
        acc = acc + yc_c[:, k][:, None] * yh_c[:, k, :]
    return acc


def _attn_kernel(yc_ref, yh_ref, bias_ref, o_ref, *, inv_sqrt_d, s_valid, d_pad):
    # yc_ref  : [TB, Dp]      current state tile
    # yh_ref  : [TB, Dp, Sp]  history-of-states tile (lane-dense Sp)
    # bias_ref: [1, Sp]       fused beta/h bias row (zeros if unused)
    # o_ref   : [TB, Sp]      softmax attention weights (+ bias)
    tb, sp = o_ref.shape
    acc = jnp.zeros((tb, sp), jnp.float32)
    n_chunks = d_pad // 8

    if n_chunks <= 32:
        # Small D: fully static, unrolled chunk loop.
        for c in range(n_chunks):
            yc_c = yc_ref[:, c * 8:(c + 1) * 8].astype(jnp.float32)
            yh_c = yh_ref[:, c * 8:(c + 1) * 8, :].astype(jnp.float32)
            acc = _accumulate_chunk(acc, yc_c, yh_c)
    else:
        def body(c, acc):
            d0 = pl.multiple_of(c * 8, 8)
            yc_c = yc_ref[:, pl.ds(d0, 8)].astype(jnp.float32)
            yh_c = yh_ref[:, pl.ds(d0, 8), :].astype(jnp.float32)
            return _accumulate_chunk(acc, yc_c, yh_c)

        acc = lax.fori_loop(0, n_chunks, body, acc)

    scores = acc * inv_sqrt_d
    if s_valid < sp:
        # Mask padded lanes so they contribute nothing to the softmax.
        lane = lax.broadcasted_iota(jnp.int32, (tb, sp), 1)
        scores = jnp.where(lane < s_valid, scores, jnp.float32(-1e30))

    # Numerically-stable softmax over the seq_len (lane) axis.
    m = jnp.max(scores, axis=-1, keepdims=True)
    e = jnp.exp(scores - m)
    denom = jnp.sum(e, axis=-1, keepdims=True)
    r = pl.reciprocal(denom, approx=True)
    r = r * (2.0 - denom * r)  # one Newton step -> full f32 accuracy, still EUP-cheap
    out = e * r + bias_ref[...].astype(jnp.float32)
    o_ref[...] = out.astype(o_ref.dtype)


def attention_kernel_simple(t_current, t_history, y_current, y_history, **options):
    """Pallas implementation of AttentionKernel_simple.forward.

    Args:
      t_current:  [batch, 1]             (ignored — time_features == 1 in the reference)
      t_history:  [batch, seq_len, 1]    (ignored)
      y_current:  [batch, state_dim]
      y_history:  [batch, state_dim, seq_len]
      **options:  optional 'beta' and 'h' scalars for the fractional bias.

    Returns:
      [batch, seq_len] attention weights.
    """
    del t_current, t_history  # dead in the reference (time_features == 1)
    B, D, S = y_history.shape
    out_dtype = y_current.dtype

    if B == 0 or S == 0:
        return jnp.zeros((B, S), dtype=out_dtype)

    # Optional fractional-integration bias row, built once in f32 and fused
    # into the kernel epilogue.
    if "beta" in options and "h" in options:
        beta = jnp.float32(options["beta"])
        h = jnp.float32(options["h"])
        j = jnp.arange(S, dtype=jnp.float32)
        # TODO(synk): `fractional_pow` is not defined in the provided spec; assumed
        # elementwise x**beta.
        bias_row = (h ** beta) / beta * (jnp.float32(S) - j) ** beta
    else:
        bias_row = jnp.zeros((S,), jnp.float32)

    if D == 0:  # degenerate: scores are all zero -> uniform softmax
        attn = jnp.full((B, S), 1.0 / S, dtype=jnp.float32) + bias_row[None, :]
        return attn.astype(out_dtype)

    # ---- layout / tiling -----------------------------------------------------
    D_pad = _round_up(D, 8)      # sublane-aligned reduction axis
    S_pad = _round_up(S, 128)    # lane-dense history slabs + output stores
    itemsize = jnp.dtype(y_history.dtype).itemsize

    # Batch tile from a VMEM budget: ~12 MiB per (double-buffered) y_history
    # block keeps total resident VMEM well under v7x's 64 MiB while staying at
    # the HBM roofline on v5e/v6e.
    per_buf_budget = 12 * 1024 * 1024
    row_bytes = D_pad * S_pad * itemsize
    tb = max(8, (per_buf_budget // row_bytes) // 8 * 8)
    if B >= 16:
        # Keep at least 2 grid steps so megacore sharding / pipelining engage.
        tb = min(tb, _round_up((B + 1) // 2, 8))
    tb = min(tb, _round_up(B, 8), 512)
    B_pad = _round_up(B, tb)
    # TODO(synk): if D_pad * S_pad is so large that even tb == 8 blows the VMEM
    # budget, add an "arbitrary" reduction grid axis over D (scratch accumulator
    # + pl.when init/finalize) instead of shrinking S.

    yc = y_current
    yh = y_history
    if (B_pad, D_pad) != (B, D):
        yc = jnp.pad(yc, ((0, B_pad - B), (0, D_pad - D)))
    if (B_pad, D_pad, S_pad) != (B, D, S):
        yh = jnp.pad(yh, ((0, B_pad - B), (0, D_pad - D), (0, S_pad - S)))
    bias = jnp.pad(bias_row[None, :], ((0, 0), (0, S_pad - S)))

    out_itemsize = jnp.dtype(out_dtype).itemsize
    yh_block = tb * D_pad * S_pad * itemsize
    yc_block = tb * D_pad * itemsize
    out_block = tb * S_pad * out_itemsize
    bias_block = S_pad * 4
    est = 2 * (yh_block + yc_block + out_block + bias_block) + 8 * tb * S_pad * 4
    vmem_limit = int(min(max(est + (2 << 20), 32 << 20), 96 << 20))

    cost = pl.CostEstimate(
        flops=2 * B * D * S + 6 * B * S,
        transcendentals=B * S,
        bytes_accessed=(B * D * S + B * D) * itemsize + B * S * out_itemsize,
    )

    kernel = functools.partial(
        _attn_kernel,
        inv_sqrt_d=1.0 / math.sqrt(D),
        s_valid=S,
        d_pad=D_pad,
    )
    attn = pl.pallas_call(
        kernel,
        out_shape=jax.ShapeDtypeStruct((B_pad, S_pad), out_dtype),
        grid=(B_pad // tb,),
        in_specs=[
            pl.BlockSpec((tb, D_pad), lambda i: (i, 0)),
            pl.BlockSpec((tb, D_pad, S_pad), lambda i: (i, 0, 0)),
            pl.BlockSpec((1, S_pad), lambda i: (0, 0)),
        ],
        out_specs=pl.BlockSpec((tb, S_pad), lambda i: (i, 0)),
        compiler_params=pltpu.CompilerParams(
            dimension_semantics=("parallel",),
            vmem_limit_bytes=vmem_limit,
        ),
        cost_estimate=cost,
    )(yc, yh, bias)

    return attn[:B, :S]


if __name__ == "__main__":
    key = jax.random.PRNGKey(0)
    batch, state_dim, seq_len = 2, 32, 8
    k1, k2, k3, k4 = jax.random.split(key, 4)

    t_current = jax.random.uniform(k1, (batch, 1), dtype=jnp.float32)
    t_history = jax.random.uniform(k2, (batch, seq_len, 1), dtype=jnp.float32)
    y_current = jax.random.normal(k3, (batch, state_dim), dtype=jnp.float32)
    y_history = jax.random.normal(k4, (batch, state_dim, seq_len), dtype=jnp.float32)

    out = jax.block_until_ready(
        attention_kernel_simple(t_current, t_history, y_current, y_history))

    # Pure-JAX reference.
    scores = jnp.einsum("bd,bds->bs", y_current, y_history) / math.sqrt(state_dim)
    ref = jax.nn.softmax(scores, axis=-1)
    assert out.shape == (batch, seq_len) and out.dtype == y_current.dtype
    assert jnp.allclose(out, ref, atol=2e-5, rtol=1e-4), "attention kernel mismatch"

    # Optional beta/h branch.
    beta, h = 0.5, 0.1
    out2 = jax.block_until_ready(
        attention_kernel_simple(
            t_current, t_history, y_current, y_history, beta=beta, h=h))
    j = jnp.arange(seq_len, dtype=jnp.float32)
    bias = (h ** beta) / beta * (seq_len - j) ** beta
    assert jnp.allclose(out2, ref + bias, atol=2e-5, rtol=1e-4), "beta/h branch mismatch"

    print("KERNEL_OK")
</pallas_src>

<mosaic_0001>
module attributes {stable_mosaic.version = 11 : i64} {
  func.func @_attn_kernel(%arg0: i32, %arg1: memref<8x32xf32, #tpu.memory_space<vmem>>, %arg2: memref<8x32x128xf32, #tpu.memory_space<vmem>>, %arg3: memref<1x128xf32, #tpu.memory_space<vmem>>, %arg4: memref<8x128xf32, #tpu.memory_space<vmem>>) attributes {dimension_semantics = [#tpu.dimension_semantics<parallel>], iteration_bounds = array<i64: 1>, scalar_prefetch = 0 : i64, scratch_operands = 0 : i64, tpu.core_type = #tpu.core_type<tc>, window_params = [{transform_indices = @transform_0, window_bounds = array<i64: 8, 32>}, {transform_indices = @transform_1, window_bounds = array<i64: 8, 32, 128>}, {pipeline_mode = #tpu.pipeline_mode<synchronous>, transform_indices = @transform_2, window_bounds = array<i64: 1, 128>}, {transform_indices = @transform_3, window_bounds = array<i64: 8, 128>}]} {
    %cst = arith.constant 0.000000e+00 : f32
    %0 = vector.broadcast %cst : f32 to vector<8x128xf32>
    %c0 = arith.constant 0 : index
    %c0_0 = arith.constant 0 : index
    %1 = vector.load %arg1[%c0, %c0_0] : memref<8x32xf32, #tpu.memory_space<vmem>>, vector<8x8xf32>
    %c0_1 = arith.constant 0 : index
    %c0_2 = arith.constant 0 : index
    %c0_3 = arith.constant 0 : index
    %2 = vector.load %arg2[%c0_1, %c0_2, %c0_3] : memref<8x32x128xf32, #tpu.memory_space<vmem>>, vector<8x8x128xf32>
    %3 = vector.extract_strided_slice %1 {offsets = [0, 0], sizes = [8, 1], strides = [1, 1]} : vector<8x8xf32> to vector<8x1xf32>
    %4 = vector.shape_cast %3 : vector<8x1xf32> to vector<8xf32>
    %5 = vector.shape_cast %4 : vector<8xf32> to vector<8x1xf32>
    %6 = vector.extract_strided_slice %2 {offsets = [0, 0, 0], sizes = [8, 1, 128], strides = [1, 1, 1]} : vector<8x8x128xf32> to vector<8x1x128xf32>
    %7 = vector.shape_cast %6 : vector<8x1x128xf32> to vector<8x128xf32>
    %8 = vector.broadcast %5 : vector<8x1xf32> to vector<8x128xf32>
    %9 = arith.mulf %8, %7 : vector<8x128xf32>
    %10 = arith.addf %0, %9 : vector<8x128xf32>
    %11 = vector.extract_strided_slice %1 {offsets = [0, 1], sizes = [8, 1], strides = [1, 1]} : vector<8x8xf32> to vector<8x1xf32>
    %12 = vector.shape_cast %11 : vector<8x1xf32> to vector<8xf32>
    %13 = vector.shape_cast %12 : vector<8xf32> to vector<8x1xf32>
    %14 = vector.extract_strided_slice %2 {offsets = [0, 1, 0], sizes = [8, 1, 128], strides = [1, 1, 1]} : vector<8x8x128xf32> to vector<8x1x128xf32>
    %15 = vector.shape_cast %14 : vector<8x1x128xf32> to vector<8x128xf32>
    %16 = vector.broadcast %13 : vector<8x1xf32> to vector<8x128xf32>
    %17 = arith.mulf %16, %15 : vector<8x128xf32>
    %18 = arith.addf %10, %17 : vector<8x128xf32>
    %19 = vector.extract_strided_slice %1 {offsets = [0, 2], sizes = [8, 1], strides = [1, 1]} : vector<8x8xf32> to vector<8x1xf32>
    %20 = vector.shape_cast %19 : vector<8x1xf32> to vector<8xf32>
    %21 = vector.shape_cast %20 : vector<8xf32> to vector<8x1xf32>
    %22 = vector.extract_strided_slice %2 {offsets = [0, 2, 0], sizes = [8, 1, 128], strides = [1, 1, 1]} : vector<8x8x128xf32> to vector<8x1x128xf32>
    %23 = vector.shape_cast %22 : vector<8x1x128xf32> to vector<8x128xf32>
    %24 = vector.broadcast %21 : vector<8x1xf32> to vector<8x128xf32>
    %25 = arith.mulf %24, %23 : vector<8x128xf32>
    %26 = arith.addf %18, %25 : vector<8x128xf32>
    %27 = vector.extract_strided_slice %1 {offsets = [0, 3], sizes = [8, 1], strides = [1, 1]} : vector<8x8xf32> to vector<8x1xf32>
    %28 = vector.shape_cast %27 : vector<8x1xf32> to vector<8xf32>
    %29 = vector.shape_cast %28 : vector<8xf32> to vector<8x1xf32>
    %30 = vector.extract_strided_slice %2 {offsets = [0, 3, 0], sizes = [8, 1, 128], strides = [1, 1, 1]} : vector<8x8x128xf32> to vector<8x1x128xf32>
    %31 = vector.shape_cast %30 : vector<8x1x128xf32> to vector<8x128xf32>
    %32 = vector.broadcast %29 : vector<8x1xf32> to vector<8x128xf32>
    %33 = arith.mulf %32, %31 : vector<8x128xf32>
    %34 = arith.addf %26, %33 : vector<8x128xf32>
    %35 = vector.extract_strided_slice %1 {offsets = [0, 4], sizes = [8, 1], strides = [1, 1]} : vector<8x8xf32> to vector<8x1xf32>
    %36 = vector.shape_cast %35 : vector<8x1xf32> to vector<8xf32>
    %37 = vector.shape_cast %36 : vector<8xf32> to vector<8x1xf32>
    %38 = vector.extract_strided_slice %2 {offsets = [0, 4, 0], sizes = [8, 1, 128], strides = [1, 1, 1]} : vector<8x8x128xf32> to vector<8x1x128xf32>
    %39 = vector.shape_cast %38 : vector<8x1x128xf32> to vector<8x128xf32>
    %40 = vector.broadcast %37 : vector<8x1xf32> to vector<8x128xf32>
    %41 = arith.mulf %40, %39 : vector<8x128xf32>
    %42 = arith.addf %34, %41 : vector<8x128xf32>
    %43 = vector.extract_strided_slice %1 {offsets = [0, 5], sizes = [8, 1], strides = [1, 1]} : vector<8x8xf32> to vector<8x1xf32>
    %44 = vector.shape_cast %43 : vector<8x1xf32> to vector<8xf32>
    %45 = vector.shape_cast %44 : vector<8xf32> to vector<8x1xf32>
    %46 = vector.extract_strided_slice %2 {offsets = [0, 5, 0], sizes = [8, 1, 128], strides = [1, 1, 1]} : vector<8x8x128xf32> to vector<8x1x128xf32>
    %47 = vector.shape_cast %46 : vector<8x1x128xf32> to vector<8x128xf32>
    %48 = vector.broadcast %45 : vector<8x1xf32> to vector<8x128xf32>
    %49 = arith.mulf %48, %47 : vector<8x128xf32>
    %50 = arith.addf %42, %49 : vector<8x128xf32>
    %51 = vector.extract_strided_slice %1 {offsets = [0, 6], sizes = [8, 1], strides = [1, 1]} : vector<8x8xf32> to vector<8x1xf32>
    %52 = vector.shape_cast %51 : vector<8x1xf32> to vector<8xf32>
    %53 = vector.shape_cast %52 : vector<8xf32> to vector<8x1xf32>
    %54 = vector.extract_strided_slice %2 {offsets = [0, 6, 0], sizes = [8, 1, 128], strides = [1, 1, 1]} : vector<8x8x128xf32> to vector<8x1x128xf32>
    %55 = vector.shape_cast %54 : vector<8x1x128xf32> to vector<8x128xf32>
    %56 = vector.broadcast %53 : vector<8x1xf32> to vector<8x128xf32>
    %57 = arith.mulf %56, %55 : vector<8x128xf32>
    %58 = arith.addf %50, %57 : vector<8x128xf32>
    %59 = vector.extract_strided_slice %1 {offsets = [0, 7], sizes = [8, 1], strides = [1, 1]} : vector<8x8xf32> to vector<8x1xf32>
    %60 = vector.shape_cast %59 : vector<8x1xf32> to vector<8xf32>
    %61 = vector.shape_cast %60 : vector<8xf32> to vector<8x1xf32>
    %62 = vector.extract_strided_slice %2 {offsets = [0, 7, 0], sizes = [8, 1, 128], strides = [1, 1, 1]} : vector<8x8x128xf32> to vector<8x1x128xf32>
    %63 = vector.shape_cast %62 : vector<8x1x128xf32> to vector<8x128xf32>
    %64 = vector.broadcast %61 : vector<8x1xf32> to vector<8x128xf32>
    %65 = arith.mulf %64, %63 : vector<8x128xf32>
    %66 = arith.addf %58, %65 : vector<8x128xf32>
    %c0_4 = arith.constant 0 : index
    %c8 = arith.constant 8 : index
    %67 = vector.load %arg1[%c0_4, %c8] : memref<8x32xf32, #tpu.memory_space<vmem>>, vector<8x8xf32>
    %c0_5 = arith.constant 0 : index
    %c8_6 = arith.constant 8 : index
    %c0_7 = arith.constant 0 : index
    %68 = vector.load %arg2[%c0_5, %c8_6, %c0_7] : memref<8x32x128xf32, #tpu.memory_space<vmem>>, vector<8x8x128xf32>
    %69 = vector.extract_strided_slice %67 {offsets = [0, 0], sizes = [8, 1], strides = [1, 1]} : vector<8x8xf32> to vector<8x1xf32>
    %70 = vector.shape_cast %69 : vector<8x1xf32> to vector<8xf32>
    %71 = vector.shape_cast %70 : vector<8xf32> to vector<8x1xf32>
    %72 = vector.extract_strided_slice %68 {offsets = [0, 0, 0], sizes = [8, 1, 128], strides = [1, 1, 1]} : vector<8x8x128xf32> to vector<8x1x128xf32>
    %73 = vector.shape_cast %72 : vector<8x1x128xf32> to vector<8x128xf32>
    %74 = vector.broadcast %71 : vector<8x1xf32> to vector<8x128xf32>
    %75 = arith.mulf %74, %73 : vector<8x128xf32>
    %76 = arith.addf %66, %75 : vector<8x128xf32>
    %77 = vector.extract_strided_slice %67 {offsets = [0, 1], sizes = [8, 1], strides = [1, 1]} : vector<8x8xf32> to vector<8x1xf32>
    %78 = vector.shape_cast %77 : vector<8x1xf32> to vector<8xf32>
    %79 = vector.shape_cast %78 : vector<8xf32> to vector<8x1xf32>
    %80 = vector.extract_strided_slice %68 {offsets = [0, 1, 0], sizes = [8, 1, 128], strides = [1, 1, 1]} : vector<8x8x128xf32> to vector<8x1x128xf32>
    %81 = vector.shape_cast %80 : vector<8x1x128xf32> to vector<8x128xf32>
    %82 = vector.broadcast %79 : vector<8x1xf32> to vector<8x128xf32>
    %83 = arith.mulf %82, %81 : vector<8x128xf32>
    %84 = arith.addf %76, %83 : vector<8x128xf32>
    %85 = vector.extract_strided_slice %67 {offsets = [0, 2], sizes = [8, 1], strides = [1, 1]} : vector<8x8xf32> to vector<8x1xf32>
    %86 = vector.shape_cast %85 : vector<8x1xf32> to vector<8xf32>
    %87 = vector.shape_cast %86 : vector<8xf32> to vector<8x1xf32>
    %88 = vector.extract_strided_slice %68 {offsets = [0, 2, 0], sizes = [8, 1, 128], strides = [1, 1, 1]} : vector<8x8x128xf32> to vector<8x1x128xf32>
    %89 = vector.shape_cast %88 : vector<8x1x128xf32> to vector<8x128xf32>
    %90 = vector.broadcast %87 : vector<8x1xf32> to vector<8x128xf32>
    %91 = arith.mulf %90, %89 : vector<8x128xf32>
    %92 = arith.addf %84, %91 : vector<8x128xf32>
    %93 = vector.extract_strided_slice %67 {offsets = [0, 3], sizes = [8, 1], strides = [1, 1]} : vector<8x8xf32> to vector<8x1xf32>
    %94 = vector.shape_cast %93 : vector<8x1xf32> to vector<8xf32>
    %95 = vector.shape_cast %94 : vector<8xf32> to vector<8x1xf32>
    %96 = vector.extract_strided_slice %68 {offsets = [0, 3, 0], sizes = [8, 1, 128], strides = [1, 1, 1]} : vector<8x8x128xf32> to vector<8x1x128xf32>
    %97 = vector.shape_cast %96 : vector<8x1x128xf32> to vector<8x128xf32>
    %98 = vector.broadcast %95 : vector<8x1xf32> to vector<8x128xf32>
    %99 = arith.mulf %98, %97 : vector<8x128xf32>
    %100 = arith.addf %92, %99 : vector<8x128xf32>
    %101 = vector.extract_strided_slice %67 {offsets = [0, 4], sizes = [8, 1], strides = [1, 1]} : vector<8x8xf32> to vector<8x1xf32>
    %102 = vector.shape_cast %101 : vector<8x1xf32> to vector<8xf32>
    %103 = vector.shape_cast %102 : vector<8xf32> to vector<8x1xf32>
    %104 = vector.extract_strided_slice %68 {offsets = [0, 4, 0], sizes = [8, 1, 128], strides = [1, 1, 1]} : vector<8x8x128xf32> to vector<8x1x128xf32>
    %105 = vector.shape_cast %104 : vector<8x1x128xf32> to vector<8x128xf32>
    %106 = vector.broadcast %103 : vector<8x1xf32> to vector<8x128xf32>
    %107 = arith.mulf %106, %105 : vector<8x128xf32>
    %108 = arith.addf %100, %107 : vector<8x128xf32>
    %109 = vector.extract_strided_slice %67 {offsets = [0, 5], sizes = [8, 1], strides = [1, 1]} : vector<8x8xf32> to vector<8x1xf32>
    %110 = vector.shape_cast %109 : vector<8x1xf32> to vector<8xf32>
    %111 = vector.shape_cast %110 : vector<8xf32> to vector<8x1xf32>
    %112 = vector.extract_strided_slice %68 {offsets = [0, 5, 0], sizes = [8, 1, 128], strides = [1, 1, 1]} : vector<8x8x128xf32> to vector<8x1x128xf32>
    %113 = vector.shape_cast %112 : vector<8x1x128xf32> to vector<8x128xf32>
    %114 = vector.broadcast %111 : vector<8x1xf32> to vector<8x128xf32>
    %115 = arith.mulf %114, %113 : vector<8x128xf32>
    %116 = arith.addf %108, %115 : vector<8x128xf32>
    %117 = vector.extract_strided_slice %67 {offsets = [0, 6], sizes = [8, 1], strides = [1, 1]} : vector<8x8xf32> to vector<8x1xf32>
    %118 = vector.shape_cast %117 : vector<8x1xf32> to vector<8xf32>
    %119 = vector.shape_cast %118 : vector<8xf32> to vector<8x1xf32>
    %120 = vector.extract_strided_slice %68 {offsets = [0, 6, 0], sizes = [8, 1, 128], strides = [1, 1, 1]} : vector<8x8x128xf32> to vector<8x1x128xf32>
    %121 = vector.shape_cast %120 : vector<8x1x128xf32> to vector<8x128xf32>
    %122 = vector.broadcast %119 : vector<8x1xf32> to vector<8x128xf32>
    %123 = arith.mulf %122, %121 : vector<8x128xf32>
    %124 = arith.addf %116, %123 : vector<8x128xf32>
    %125 = vector.extract_strided_slice %67 {offsets = [0, 7], sizes = [8, 1], strides = [1, 1]} : vector<8x8xf32> to vector<8x1xf32>
    %126 = vector.shape_cast %125 : vector<8x1xf32> to vector<8xf32>
    %127 = vector.shape_cast %126 : vector<8xf32> to vector<8x1xf32>
    %128 = vector.extract_strided_slice %68 {offsets = [0, 7, 0], sizes = [8, 1, 128], strides = [1, 1, 1]} : vector<8x8x128xf32> to vector<8x1x128xf32>
    %129 = vector.shape_cast %128 : vector<8x1x128xf32> to vector<8x128xf32>
    %130 = vector.broadcast %127 : vector<8x1xf32> to vector<8x128xf32>
    %131 = arith.mulf %130, %129 : vector<8x128xf32>
    %132 = arith.addf %124, %131 : vector<8x128xf32>
    %c0_8 = arith.constant 0 : index
    %c16 = arith.constant 16 : index
    %133 = vector.load %arg1[%c0_8, %c16] : memref<8x32xf32, #tpu.memory_space<vmem>>, vector<8x8xf32>
    %c0_9 = arith.constant 0 : index
    %c16_10 = arith.constant 16 : index
    %c0_11 = arith.constant 0 : index
    %134 = vector.load %arg2[%c0_9, %c16_10, %c0_11] : memref<8x32x128xf32, #tpu.memory_space<vmem>>, vector<8x8x128xf32>
    %135 = vector.extract_strided_slice %133 {offsets = [0, 0], sizes = [8, 1], strides = [1, 1]} : vector<8x8xf32> to vector<8x1xf32>
    %136 = vector.shape_cast %135 : vector<8x1xf32> to vector<8xf32>
    %137 = vector.shape_cast %136 : vector<8xf32> to vector<8x1xf32>
    %138 = vector.extract_strided_slice %134 {offsets = [0, 0, 0], sizes = [8, 1, 128], strides = [1, 1, 1]} : vector<8x8x128xf32> to vector<8x1x128xf32>
    %139 = vector.shape_cast %138 : vector<8x1x128xf32> to vector<8x128xf32>
    %140 = vector.broadcast %137 : vector<8x1xf32> to vector<8x128xf32>
    %141 = arith.mulf %140, %139 : vector<8x128xf32>
    %142 = arith.addf %132, %141 : vector<8x128xf32>
    %143 = vector.extract_strided_slice %133 {offsets = [0, 1], sizes = [8, 1], strides = [1, 1]} : vector<8x8xf32> to vector<8x1xf32>
    %144 = vector.shape_cast %143 : vector<8x1xf32> to vector<8xf32>
    %145 = vector.shape_cast %144 : vector<8xf32> to vector<8x1xf32>
    %146 = vector.extract_strided_slice %134 {offsets = [0, 1, 0], sizes = [8, 1, 128], strides = [1, 1, 1]} : vector<8x8x128xf32> to vector<8x1x128xf32>
    %147 = vector.shape_cast %146 : vector<8x1x128xf32> to vector<8x128xf32>
    %148 = vector.broadcast %145 : vector<8x1xf32> to vector<8x128xf32>
    %149 = arith.mulf %148, %147 : vector<8x128xf32>
    %150 = arith.addf %142, %149 : vector<8x128xf32>
    %151 = vector.extract_strided_slice %133 {offsets = [0, 2], sizes = [8, 1], strides = [1, 1]} : vector<8x8xf32> to vector<8x1xf32>
    %152 = vector.shape_cast %151 : vector<8x1xf32> to vector<8xf32>
    %153 = vector.shape_cast %152 : vector<8xf32> to vector<8x1xf32>
    %154 = vector.extract_strided_slice %134 {offsets = [0, 2, 0], sizes = [8, 1, 128], strides = [1, 1, 1]} : vector<8x8x128xf32> to vector<8x1x128xf32>
    %155 = vector.shape_cast %154 : vector<8x1x128xf32> to vector<8x128xf32>
    %156 = vector.broadcast %153 : vector<8x1xf32> to vector<8x128xf32>
    %157 = arith.mulf %156, %155 : vector<8x128xf32>
    %158 = arith.addf %150, %157 : vector<8x128xf32>
    %159 = vector.extract_strided_slice %133 {offsets = [0, 3], sizes = [8, 1], strides = [1, 1]} : vector<8x8xf32> to vector<8x1xf32>
    %160 = vector.shape_cast %159 : vector<8x1xf32> to vector<8xf32>
    %161 = vector.shape_cast %160 : vector<8xf32> to vector<8x1xf32>
    %162 = vector.extract_strided_slice %134 {offsets = [0, 3, 0], sizes = [8, 1, 128], strides = [1, 1, 1]} : vector<8x8x128xf32> to vector<8x1x128xf32>
    %163 = vector.shape_cast %162 : vector<8x1x128xf32> to vector<8x128xf32>
    %164 = vector.broadcast %161 : vector<8x1xf32> to vector<8x128xf32>
    %165 = arith.mulf %164, %163 : vector<8x128xf32>
    %166 = arith.addf %158, %165 : vector<8x128xf32>
    %167 = vector.extract_strided_slice %133 {offsets = [0, 4], sizes = [8, 1], strides = [1, 1]} : vector<8x8xf32> to vector<8x1xf32>
    %168 = vector.shape_cast %167 : vector<8x1xf32> to vector<8xf32>
    %169 = vector.shape_cast %168 : vector<8xf32> to vector<8x1xf32>
    %170 = vector.extract_strided_slice %134 {offsets = [0, 4, 0], sizes = [8, 1, 128], strides = [1, 1, 1]} : vector<8x8x128xf32> to vector<8x1x128xf32>
    %171 = vector.shape_cast %170 : vector<8x1x128xf32> to vector<8x128xf32>
    %172 = vector.broadcast %169 : vector<8x1xf32> to vector<8x128xf32>
    %173 = arith.mulf %172, %171 : vector<8x128xf32>
    %174 = arith.addf %166, %173 : vector<8x128xf32>
    %175 = vector.extract_strided_slice %133 {offsets = [0, 5], sizes = [8, 1], strides = [1, 1]} : vector<8x8xf32> to vector<8x1xf32>
    %176 = vector.shape_cast %175 : vector<8x1xf32> to vector<8xf32>
    %177 = vector.shape_cast %176 : vector<8xf32> to vector<8x1xf32>
    %178 = vector.extract_strided_slice %134 {offsets = [0, 5, 0], sizes = [8, 1, 128], strides = [1, 1, 1]} : vector<8x8x128xf32> to vector<8x1x128xf32>
    %179 = vector.shape_cast %178 : vector<8x1x128xf32> to vector<8x128xf32>
    %180 = vector.broadcast %177 : vector<8x1xf32> to vector<8x128xf32>
    %181 = arith.mulf %180, %179 : vector<8x128xf32>
    %182 = arith.addf %174, %181 : vector<8x128xf32>
    %183 = vector.extract_strided_slice %133 {offsets = [0, 6], sizes = [8, 1], strides = [1, 1]} : vector<8x8xf32> to vector<8x1xf32>
    %184 = vector.shape_cast %183 : vector<8x1xf32> to vector<8xf32>
    %185 = vector.shape_cast %184 : vector<8xf32> to vector<8x1xf32>
    %186 = vector.extract_strided_slice %134 {offsets = [0, 6, 0], sizes = [8, 1, 128], strides = [1, 1, 1]} : vector<8x8x128xf32> to vector<8x1x128xf32>
    %187 = vector.shape_cast %186 : vector<8x1x128xf32> to vector<8x128xf32>
    %188 = vector.broadcast %185 : vector<8x1xf32> to vector<8x128xf32>
    %189 = arith.mulf %188, %187 : vector<8x128xf32>
    %190 = arith.addf %182, %189 : vector<8x128xf32>
    %191 = vector.extract_strided_slice %133 {offsets = [0, 7], sizes = [8, 1], strides = [1, 1]} : vector<8x8xf32> to vector<8x1xf32>
    %192 = vector.shape_cast %191 : vector<8x1xf32> to vector<8xf32>
    %193 = vector.shape_cast %192 : vector<8xf32> to vector<8x1xf32>
    %194 = vector.extract_strided_slice %134 {offsets = [0, 7, 0], sizes = [8, 1, 128], strides = [1, 1, 1]} : vector<8x8x128xf32> to vector<8x1x128xf32>
    %195 = vector.shape_cast %194 : vector<8x1x128xf32> to vector<8x128xf32>
    %196 = vector.broadcast %193 : vector<8x1xf32> to vector<8x128xf32>
    %197 = arith.mulf %196, %195 : vector<8x128xf32>
    %198 = arith.addf %190, %197 : vector<8x128xf32>
    %c0_12 = arith.constant 0 : index
    %c24 = arith.constant 24 : index
    %199 = vector.load %arg1[%c0_12, %c24] : memref<8x32xf32, #tpu.memory_space<vmem>>, vector<8x8xf32>
    %c0_13 = arith.constant 0 : index
    %c24_14 = arith.constant 24 : index
    %c0_15 = arith.constant 0 : index
    %200 = vector.load %arg2[%c0_13, %c24_14, %c0_15] : memref<8x32x128xf32, #tpu.memory_space<vmem>>, vector<8x8x128xf32>
    %201 = vector.extract_strided_slice %199 {offsets = [0, 0], sizes = [8, 1], strides = [1, 1]} : vector<8x8xf32> to vector<8x1xf32>
    %202 = vector.shape_cast %201 : vector<8x1xf32> to vector<8xf32>
    %203 = vector.shape_cast %202 : vector<8xf32> to vector<8x1xf32>
    %204 = vector.extract_strided_slice %200 {offsets = [0, 0, 0], sizes = [8, 1, 128], strides = [1, 1, 1]} : vector<8x8x128xf32> to vector<8x1x128xf32>
    %205 = vector.shape_cast %204 : vector<8x1x128xf32> to vector<8x128xf32>
    %206 = vector.broadcast %203 : vector<8x1xf32> to vector<8x128xf32>
    %207 = arith.mulf %206, %205 : vector<8x128xf32>
    %208 = arith.addf %198, %207 : vector<8x128xf32>
    %209 = vector.extract_strided_slice %199 {offsets = [0, 1], sizes = [8, 1], strides = [1, 1]} : vector<8x8xf32> to vector<8x1xf32>
    %210 = vector.shape_cast %209 : vector<8x1xf32> to vector<8xf32>
    %211 = vector.shape_cast %210 : vector<8xf32> to vector<8x1xf32>
    %212 = vector.extract_strided_slice %200 {offsets = [0, 1, 0], sizes = [8, 1, 128], strides = [1, 1, 1]} : vector<8x8x128xf32> to vector<8x1x128xf32>
    %213 = vector.shape_cast %212 : vector<8x1x128xf32> to vector<8x128xf32>
    %214 = vector.broadcast %211 : vector<8x1xf32> to vector<8x128xf32>
    %215 = arith.mulf %214, %213 : vector<8x128xf32>
    %216 = arith.addf %208, %215 : vector<8x128xf32>
    %217 = vector.extract_strided_slice %199 {offsets = [0, 2], sizes = [8, 1], strides = [1, 1]} : vector<8x8xf32> to vector<8x1xf32>
    %218 = vector.shape_cast %217 : vector<8x1xf32> to vector<8xf32>
    %219 = vector.shape_cast %218 : vector<8xf32> to vector<8x1xf32>
    %220 = vector.extract_strided_slice %200 {offsets = [0, 2, 0], sizes = [8, 1, 128], strides = [1, 1, 1]} : vector<8x8x128xf32> to vector<8x1x128xf32>
    %221 = vector.shape_cast %220 : vector<8x1x128xf32> to vector<8x128xf32>
    %222 = vector.broadcast %219 : vector<8x1xf32> to vector<8x128xf32>
    %223 = arith.mulf %222, %221 : vector<8x128xf32>
    %224 = arith.addf %216, %223 : vector<8x128xf32>
    %225 = vector.extract_strided_slice %199 {offsets = [0, 3], sizes = [8, 1], strides = [1, 1]} : vector<8x8xf32> to vector<8x1xf32>
    %226 = vector.shape_cast %225 : vector<8x1xf32> to vector<8xf32>
    %227 = vector.shape_cast %226 : vector<8xf32> to vector<8x1xf32>
    %228 = vector.extract_strided_slice %200 {offsets = [0, 3, 0], sizes = [8, 1, 128], strides = [1, 1, 1]} : vector<8x8x128xf32> to vector<8x1x128xf32>
    %229 = vector.shape_cast %228 : vector<8x1x128xf32> to vector<8x128xf32>
    %230 = vector.broadcast %227 : vector<8x1xf32> to vector<8x128xf32>
    %231 = arith.mulf %230, %229 : vector<8x128xf32>
    %232 = arith.addf %224, %231 : vector<8x128xf32>
    %233 = vector.extract_strided_slice %199 {offsets = [0, 4], sizes = [8, 1], strides = [1, 1]} : vector<8x8xf32> to vector<8x1xf32>
    %234 = vector.shape_cast %233 : vector<8x1xf32> to vector<8xf32>
    %235 = vector.shape_cast %234 : vector<8xf32> to vector<8x1xf32>
    %236 = vector.extract_strided_slice %200 {offsets = [0, 4, 0], sizes = [8, 1, 128], strides = [1, 1, 1]} : vector<8x8x128xf32> to vector<8x1x128xf32>
    %237 = vector.shape_cast %236 : vector<8x1x128xf32> to vector<8x128xf32>
    %238 = vector.broadcast %235 : vector<8x1xf32> to vector<8x128xf32>
    %239 = arith.mulf %238, %237 : vector<8x128xf32>
    %240 = arith.addf %232, %239 : vector<8x128xf32>
    %241 = vector.extract_strided_slice %199 {offsets = [0, 5], sizes = [8, 1], strides = [1, 1]} : vector<8x8xf32> to vector<8x1xf32>
    %242 = vector.shape_cast %241 : vector<8x1xf32> to vector<8xf32>
    %243 = vector.shape_cast %242 : vector<8xf32> to vector<8x1xf32>
    %244 = vector.extract_strided_slice %200 {offsets = [0, 5, 0], sizes = [8, 1, 128], strides = [1, 1, 1]} : vector<8x8x128xf32> to vector<8x1x128xf32>
    %245 = vector.shape_cast %244 : vector<8x1x128xf32> to vector<8x128xf32>
    %246 = vector.broadcast %243 : vector<8x1xf32> to vector<8x128xf32>
    %247 = arith.mulf %246, %245 : vector<8x128xf32>
    %248 = arith.addf %240, %247 : vector<8x128xf32>
    %249 = vector.extract_strided_slice %199 {offsets = [0, 6], sizes = [8, 1], strides = [1, 1]} : vector<8x8xf32> to vector<8x1xf32>
    %250 = vector.shape_cast %249 : vector<8x1xf32> to vector<8xf32>
    %251 = vector.shape_cast %250 : vector<8xf32> to vector<8x1xf32>
    %252 = vector.extract_strided_slice %200 {offsets = [0, 6, 0], sizes = [8, 1, 128], strides = [1, 1, 1]} : vector<8x8x128xf32> to vector<8x1x128xf32>
    %253 = vector.shape_cast %252 : vector<8x1x128xf32> to vector<8x128xf32>
    %254 = vector.broadcast %251 : vector<8x1xf32> to vector<8x128xf32>
    %255 = arith.mulf %254, %253 : vector<8x128xf32>
    %256 = arith.addf %248, %255 : vector<8x128xf32>
    %257 = vector.extract_strided_slice %199 {offsets = [0, 7], sizes = [8, 1], strides = [1, 1]} : vector<8x8xf32> to vector<8x1xf32>
    %258 = vector.shape_cast %257 : vector<8x1xf32> to vector<8xf32>
    %259 = vector.shape_cast %258 : vector<8xf32> to vector<8x1xf32>
    %260 = vector.extract_strided_slice %200 {offsets = [0, 7, 0], sizes = [8, 1, 128], strides = [1, 1, 1]} : vector<8x8x128xf32> to vector<8x1x128xf32>
    %261 = vector.shape_cast %260 : vector<8x1x128xf32> to vector<8x128xf32>
    %262 = vector.broadcast %259 : vector<8x1xf32> to vector<8x128xf32>
    %263 = arith.mulf %262, %261 : vector<8x128xf32>
    %264 = arith.addf %256, %263 : vector<8x128xf32>
    %cst_16 = arith.constant 0.176776692 : f32
    %265 = vector.broadcast %cst_16 : f32 to vector<8x128xf32>
    %266 = arith.mulf %264, %265 : vector<8x128xf32>
    %267 = tpu.iota {dimensions = array<i32: 1>} : vector<8x128xi32>
    %c8_i32 = arith.constant 8 : i32
    %268 = vector.broadcast %c8_i32 : i32 to vector<8x128xi32>
    %269 = arith.cmpi slt, %267, %268 : vector<8x128xi32>
    %cst_17 = arith.constant -1.000000e+30 : f32
    %270 = vector.broadcast %cst_17 : f32 to vector<8x128xf32>
    %271 = arith.select %269, %266, %270 : vector<8x128xi1>, vector<8x128xf32>
    %cst_18 = arith.constant dense<0xFF800000> : vector<8xf32>
    %272 = vector.multi_reduction <maximumf>, %271, %cst_18 [1] : vector<8x128xf32> to vector<8xf32>
    %273 = vector.shape_cast %272 : vector<8xf32> to vector<8x1xf32>
    %274 = vector.broadcast %273 : vector<8x1xf32> to vector<8x128xf32>
    %275 = arith.subf %271, %274 : vector<8x128xf32>
    %276 = math.exp %275 : vector<8x128xf32>
    %cst_19 = arith.constant dense<0.000000e+00> : vector<8xf32>
    %277 = vector.multi_reduction <add>, %276, %cst_19 [1] : vector<8x128xf32> to vector<8xf32>
    %278 = vector.shape_cast %277 : vector<8xf32> to vector<8x1xf32>
    %279 = tpu.reciprocal %278 {approx = true} : vector<8x1xf32> -> vector<8x1xf32>
    %280 = arith.mulf %278, %279 : vector<8x1xf32>
    %cst_20 = arith.constant 2.000000e+00 : f32
    %281 = vector.broadcast %cst_20 : f32 to vector<8x1xf32>
    %282 = arith.subf %281, %280 : vector<8x1xf32>
    %283 = arith.mulf %279, %282 : vector<8x1xf32>
    %284 = vector.broadcast %283 : vector<8x1xf32> to vector<8x128xf32>
    %285 = arith.mulf %276, %284 : vector<8x128xf32>
    %c0_21 = arith.constant 0 : index
    %c0_22 = arith.constant 0 : index
    %286 = vector.load %arg3[%c0_21, %c0_22] : memref<1x128xf32, #tpu.memory_space<vmem>>, vector<1x128xf32>
    %287 = vector.broadcast %286 : vector<1x128xf32> to vector<8x128xf32>
    %288 = arith.addf %285, %287 : vector<8x128xf32>
    %c0_23 = arith.constant 0 : index
    %c0_24 = arith.constant 0 : index
    %289 = vector.load %arg4[%c0_23, %c0_24] : memref<8x128xf32, #tpu.memory_space<vmem>>, vector<8x128xf32>
    tpu.vector_store %arg4[%c0_23, %c0_24], %288 {strides = array<i32>} : memref<8x128xf32, #tpu.memory_space<vmem>>, vector<8x128xf32>,
    return
  }
  func.func @transform_0(%arg0: i32) -> (i32, i32) {
    %c0_i32 = arith.constant 0 : i32
    %c0_i32_0 = arith.constant 0 : i32
    return %arg0, %c0_i32 : i32, i32
  }
  func.func @transform_1(%arg0: i32) -> (i32, i32, i32) {
    %c0_i32 = arith.constant 0 : i32
    %c0_i32_0 = arith.constant 0 : i32
    %c0_i32_1 = arith.constant 0 : i32
    return %arg0, %c0_i32, %c0_i32_0 : i32, i32, i32
  }
  func.func @transform_2(%arg0: i32) -> (i32, i32) {
    %c0_i32 = arith.constant 0 : i32
    %c0_i32_0 = arith.constant 0 : i32
    %c0_i32_1 = arith.constant 0 : i32
    return %c0_i32, %c0_i32_0 : i32, i32
  }
  func.func @transform_3(%arg0: i32) -> (i32, i32) {
    %c0_i32 = arith.constant 0 : i32
    %c0_i32_0 = arith.constant 0 : i32
    return %arg0, %c0_i32 : i32, i32
  }
}

</mosaic_0001>

<llo_original>
// kernel: tpu_custom_call.1
$region0: #{tpu_custom_call.1}
  #allocation0 [shape = 'u32[]', space=smem, size = 0x4, offset = 0x4, fixed_abs, tag = 'smem constant byte address 0x4 - core index']
  #allocation1 [shape = 'u32[144,128]{1,0:T(1,128)}', space=vmem, size = 0x12000, scoped, tag = 'internal scratch']
  %s0 = inlined_call_operand.hbm [shape: f32[8,32], index: 0, kind: input, shape index: {}]
  %s1 = inlined_call_operand.hbm [shape: f32[8,32,128], index: 1, kind: input, shape index: {}]
  %s2 = inlined_call_operand.vmem [shape: f32[1,128], index: 2, kind: input, shape index: {}]
  %s3 = inlined_call_operand.hbm [shape: f32[8,128], index: 3, kind: output, shape index: {}]
  %s4 = sld [smem:[#allocation0]]
  $region30: #{tpu_custom_call.1} parent=0
    _
  %s6 = ssub.s32 1, %s4
  %s7 = scalar_select 0, %s6, %s4
  $region1: #{tpu_custom_call.1} parent=0
    #allocation2 [shape = 'u8[4096]{0}', space=vmem, size = 0x1000, scoped, tag = 'input window, operand 0, single buffered']
    #allocation3 [shape = 's32[1]{0}', space=sflag, size = 0x4, scoped, tag = 'scoped memory for tpu_custom_call.1']
    #allocation4 [shape = 's32[1]{0}', space=sflag, size = 0x4, scoped, tag = 'scoped memory for tpu_custom_call.1']
    #allocation5 [shape = 'u8[131072]{0}', space=vmem, size = 0x20000, scoped, tag = 'input window, operand 1, single buffered']
    #allocation6 [shape = 's32[1]{0}', space=sflag, size = 0x4, scoped, tag = 'scoped memory for tpu_custom_call.1']
    #allocation7 [shape = 'u8[4096]{0}', space=vmem, size = 0x1000, scoped, tag = 'output window, operand 0, single buffered']
    %8 = vsyncpa [#allocation3], 0
    %9 = vsyncpa [#allocation6], 0
    %10 = vsyncpa [#allocation4], 0
    // Predicated region
    $region2: #{tpu_custom_call.1} parent=1 // pred_check
      _
    $region3: #{tpu_custom_call.1} parent=1 // pred_check_branch
      %12 = sbr.rel (0) target = $region5
    $region4: #{tpu_custom_call.1} parent=1 // pred_region
      %s14 = ssub.s32 128, 128
      %15 = vsyncadd [#allocation3], %s14
      %s17 = sshll.u32 [#allocation2], 4
      %s18 = int_to_ptr.vmem [resolvable:$true] %s17
      %20 = dma.hbm_to_vmem [thread:$0]  %s0, 128, %s18, [#allocation3]
    $region5: #{tpu_custom_call.1} parent=1 // pred_fallthru
      _
    // Predicated region
    $region6: #{tpu_custom_call.1} parent=1 // pred_check
      _
    $region7: #{tpu_custom_call.1} parent=1 // pred_check_branch
      %22 = sbr.rel (0) target = $region9
    $region8: #{tpu_custom_call.1} parent=1 // pred_region
      %s24 = ssub.s32 4096, 4096
      %25 = vsyncadd [#allocation6], %s24
      %s26 = sshll.u32 [#allocation5], 4
      %s27 = int_to_ptr.vmem [resolvable:$true] %s26
      %32 = dma.hbm_to_vmem [thread:$0]  %s1, 4096, %s27, [#allocation6], 128, 128, 8
    $region9: #{tpu_custom_call.1} parent=1 // pred_fallthru
      _
    // Predicated region
    $region10: #{tpu_custom_call.1} parent=1 // pred_check
      _
    $region11: #{tpu_custom_call.1} parent=1 // pred_check_branch
      %34 = sbr.rel (0) target = $region13
    $region12: #{tpu_custom_call.1} parent=1 // pred_region
      _
    $region13: #{tpu_custom_call.1} parent=1 // pred_fallthru
      _
    // Predicated region
    $region14: #{tpu_custom_call.1} parent=1 // pred_check
      _
    $region15: #{tpu_custom_call.1} parent=1 // pred_check_branch
      %36 = sbr.rel (0) target = $region17
    $region16: #{tpu_custom_call.1} parent=1 // pred_region
      %37 = dma.done [#allocation3], 128
    $region17: #{tpu_custom_call.1} parent=1 // pred_fallthru
      _
    // Predicated region
    $region18: #{tpu_custom_call.1} parent=1 // pred_check
      _
    $region19: #{tpu_custom_call.1} parent=1 // pred_check_branch
      %39 = sbr.rel (0) target = $region21
    $region20: #{tpu_custom_call.1} parent=1 // pred_region
      %40 = dma.done [#allocation6], 4096
    $region21: #{tpu_custom_call.1} parent=1 // pred_fallthru
      _
    %v41 = vld [vmem:[#allocation2] sm:$0xff]
    %v42 = vld [vmem:[#allocation5] sm:$0xff]
    %v43 = vld [vmem:[#allocation5 + $0x20] sm:$0xff]
    %v44 = vld [vmem:[#allocation5 + $0x40] sm:$0xff]
    %v45 = vld [vmem:[#allocation5 + $0x60] sm:$0xff]
    %v46 = vld [vmem:[#allocation5 + $0x80] sm:$0xff]
    %v47 = vld [vmem:[#allocation5 + $0xa0] sm:$0xff]
    %v48 = vld [vmem:[#allocation5 + $0xc0] sm:$0xff]
    %v49 = vld [vmem:[#allocation5 + $0xe0] sm:$0xff]
    %51 = vset.pattern.permute.xlu0 0
    %52 = vperm.xlu0 %51, %v41
    %v53 = vpop.permute.xlu0 %52
    %v63 = vrot.slane %v43, 7
    %vm64 = vcmask 1041409
    %v65 = vsel %vm64, %v63, %v42
    %v66 = vrot.slane %v44, 6
    %vm67 = vcmask 1042434
    %v68 = vsel %vm67, %v66, %v65
    %v69 = vrot.slane %v45, 5
    %vm70 = vcmask 1043459
    %v71 = vsel %vm70, %v69, %v68
    %v72 = vrot.slane %v46, 4
    %vm73 = vcmask 1044484
    %v74 = vsel %vm73, %v72, %v71
    %v75 = vrot.slane %v47, 3
    %vm76 = vcmask 1045509
    %v77 = vsel %vm76, %v75, %v74
    %v78 = vrot.slane %v48, 2
    %vm79 = vcmask 1046534
    %v80 = vsel %vm79, %v78, %v77
    %v81 = vrot.slane %v49, 1
    %vm82 = vcmask 1047559
    %v83 = vsel %vm82, %v81, %v80
    %v85 = vmul.f32 %v53, %v83
    %v86 = vadd.f32 %v85, 0.0
    %87 = vset.pattern.permute.xlu0 1
    %88 = vperm.xlu0 %87, %v41
    %v89 = vpop.permute.xlu0 %88
    %v91 = vrot.slane %v42, 1
    %v92 = vsel %vm64, %v43, %v91
    %v93 = vrot.slane %v44, 7
    %v94 = vsel %vm67, %v93, %v92
    %v95 = vrot.slane %v45, 6
    %v96 = vsel %vm70, %v95, %v94
    %v97 = vrot.slane %v46, 5
    %v98 = vsel %vm73, %v97, %v96
    %v99 = vrot.slane %v47, 4
    %v100 = vsel %vm76, %v99, %v98
    %v101 = vrot.slane %v48, 3
    %v102 = vsel %vm79, %v101, %v100
    %v103 = vrot.slane %v49, 2
    %v104 = vsel %vm82, %v103, %v102
    %v106 = vmul.f32 %v89, %v104
    %v107 = vadd.f32 %v86, %v106
    %108 = vset.pattern.permute.xlu0 2
    %109 = vperm.xlu0 %108, %v41
    %v110 = vpop.permute.xlu0 %109
    %v112 = vrot.slane %v42, 2
    %v113 = vrot.slane %v43, 1
    %v114 = vsel %vm64, %v113, %v112
    %v115 = vsel %vm67, %v44, %v114
    %v116 = vrot.slane %v45, 7
    %v117 = vsel %vm70, %v116, %v115
    %v118 = vrot.slane %v46, 6
    %v119 = vsel %vm73, %v118, %v117
    %v120 = vrot.slane %v47, 5
    %v121 = vsel %vm76, %v120, %v119
    %v122 = vrot.slane %v48, 4
    %v123 = vsel %vm79, %v122, %v121
    %v124 = vrot.slane %v49, 3
    %v125 = vsel %vm82, %v124, %v123
    %v127 = vmul.f32 %v110, %v125
    %v128 = vadd.f32 %v107, %v127
    %129 = vset.pattern.permute.xlu0 3
    %130 = vperm.xlu0 %129, %v41
    %v131 = vpop.permute.xlu0 %130
    %v133 = vrot.slane %v42, 3
    %v134 = vrot.slane %v43, 2
    %v135 = vsel %vm64, %v134, %v133
    %v136 = vrot.slane %v44, 1
    %v137 = vsel %vm67, %v136, %v135
    %v138 = vsel %vm70, %v45, %v137
    %v139 = vrot.slane %v46, 7
    %v140 = vsel %vm73, %v139, %v138
    %v141 = vrot.slane %v47, 6
    %v142 = vsel %vm76, %v141, %v140
    %v143 = vrot.slane %v48, 5
    %v144 = vsel %vm79, %v143, %v142
    %v145 = vrot.slane %v49, 4
    %v146 = vsel %vm82, %v145, %v144
    %v148 = vmul.f32 %v131, %v146
    %v149 = vadd.f32 %v128, %v148
    %150 = vset.pattern.permute.xlu0 4
    %151 = vperm.xlu0 %150, %v41
    %v152 = vpop.permute.xlu0 %151
    %v154 = vrot.slane %v42, 4
    %v155 = vrot.slane %v43, 3
    %v156 = vsel %vm64, %v155, %v154
    %v157 = vrot.slane %v44, 2
    %v158 = vsel %vm67, %v157, %v156
    %v159 = vrot.slane %v45, 1
    %v160 = vsel %vm70, %v159, %v158
    %v161 = vsel %vm73, %v46, %v160
    %v162 = vrot.slane %v47, 7
    %v163 = vsel %vm76, %v162, %v161
    %v164 = vrot.slane %v48, 6
    %v165 = vsel %vm79, %v164, %v163
    %v166 = vrot.slane %v49, 5
    %v167 = vsel %vm82, %v166, %v165
    %v169 = vmul.f32 %v152, %v167
    %v170 = vadd.f32 %v149, %v169
    %171 = vset.pattern.permute.xlu0 5
    %172 = vperm.xlu0 %171, %v41
    %v173 = vpop.permute.xlu0 %172
    %v175 = vrot.slane %v42, 5
    %v176 = vrot.slane %v43, 4
    %v177 = vsel %vm64, %v176, %v175
    %v178 = vrot.slane %v44, 3
    %v179 = vsel %vm67, %v178, %v177
    %v180 = vrot.slane %v45, 2
    %v181 = vsel %vm70, %v180, %v179
    %v182 = vrot.slane %v46, 1
    %v183 = vsel %vm73, %v182, %v181
    %v184 = vsel %vm76, %v47, %v183
    %v185 = vrot.slane %v48, 7
    %v186 = vsel %vm79, %v185, %v184
    %v187 = vrot.slane %v49, 6
    %v188 = vsel %vm82, %v187, %v186
    %v190 = vmul.f32 %v173, %v188
    %v191 = vadd.f32 %v170, %v190
    %192 = vset.pattern.permute.xlu0 6
    %193 = vperm.xlu0 %192, %v41
    %v194 = vpop.permute.xlu0 %193
    %v196 = vrot.slane %v42, 6
    %v197 = vrot.slane %v43, 5
    %v198 = vsel %vm64, %v197, %v196
    %v199 = vrot.slane %v44, 4
    %v200 = vsel %vm67, %v199, %v198
    %v201 = vrot.slane %v45, 3
    %v202 = vsel %vm70, %v201, %v200
    %v203 = vrot.slane %v46, 2
    %v204 = vsel %vm73, %v203, %v202
    %v205 = vrot.slane %v47, 1
    %v206 = vsel %vm76, %v205, %v204
    %v207 = vsel %vm79, %v48, %v206
    %v208 = vrot.slane %v49, 7
    %v209 = vsel %vm82, %v208, %v207
    %v211 = vmul.f32 %v194, %v209
    %v212 = vadd.f32 %v191, %v211
    %213 = vset.pattern.permute.xlu0 7
    %214 = vperm.xlu0 %213, %v41
    %v215 = vpop.permute.xlu0 %214
    %v217 = vrot.slane %v42, 7
    %v218 = vrot.slane %v43, 6
    %v219 = vsel %vm64, %v218, %v217
    %v220 = vrot.slane %v44, 5
    %v221 = vsel %vm67, %v220, %v219
    %v222 = vrot.slane %v45, 4
    %v223 = vsel %vm70, %v222, %v221
    %v224 = vrot.slane %v46, 3
    %v225 = vsel %vm73, %v224, %v223
    %v226 = vrot.slane %v47, 2
    %v227 = vsel %vm76, %v226, %v225
    %v228 = vrot.slane %v48, 1
    %v229 = vsel %vm79, %v228, %v227
    %v230 = vsel %vm82, %v49, %v229
    %v232 = vmul.f32 %v215, %v230
    %v233 = vadd.f32 %v212, %v232
    %v234 = vld [vmem:[#allocation5 + $0x8] sm:$0xff]
    %v235 = vld [vmem:[#allocation5 + $0x28] sm:$0xff]
    %v236 = vld [vmem:[#allocation5 + $0x48] sm:$0xff]
    %v237 = vld [vmem:[#allocation5 + $0x68] sm:$0xff]
    %v238 = vld [vmem:[#allocation5 + $0x88] sm:$0xff]
    %v239 = vld [vmem:[#allocation5 + $0xa8] sm:$0xff]
    %v240 = vld [vmem:[#allocation5 + $0xc8] sm:$0xff]
    %v241 = vld [vmem:[#allocation5 + $0xe8] sm:$0xff]
    %242 = vset.pattern.permute.xlu0 8
    %243 = vperm.xlu0 %242, %v41
    %v244 = vpop.permute.xlu0 %243
    %v254 = vrot.slane %v235, 7
    %v255 = vsel %vm64, %v254, %v234
    %v256 = vrot.slane %v236, 6
    %v257 = vsel %vm67, %v256, %v255
    %v258 = vrot.slane %v237, 5
    %v259 = vsel %vm70, %v258, %v257
    %v260 = vrot.slane %v238, 4
    %v261 = vsel %vm73, %v260, %v259
    %v262 = vrot.slane %v239, 3
    %v263 = vsel %vm76, %v262, %v261
    %v264 = vrot.slane %v240, 2
    %v265 = vsel %vm79, %v264, %v263
    %v266 = vrot.slane %v241, 1
    %v267 = vsel %vm82, %v266, %v265
    %v269 = vmul.f32 %v244, %v267
    %v270 = vadd.f32 %v233, %v269
    %271 = vset.pattern.permute.xlu0 9
    %272 = vperm.xlu0 %271, %v41
    %v273 = vpop.permute.xlu0 %272
    %v275 = vrot.slane %v234, 1
    %v276 = vsel %vm64, %v235, %v275
    %v277 = vrot.slane %v236, 7
    %v278 = vsel %vm67, %v277, %v276
    %v279 = vrot.slane %v237, 6
    %v280 = vsel %vm70, %v279, %v278
    %v281 = vrot.slane %v238, 5
    %v282 = vsel %vm73, %v281, %v280
    %v283 = vrot.slane %v239, 4
    %v284 = vsel %vm76, %v283, %v282
    %v285 = vrot.slane %v240, 3
    %v286 = vsel %vm79, %v285, %v284
    %v287 = vrot.slane %v241, 2
    %v288 = vsel %vm82, %v287, %v286
    %v290 = vmul.f32 %v273, %v288
    %v291 = vadd.f32 %v270, %v290
    %292 = vset.pattern.permute.xlu0 10
    %293 = vperm.xlu0 %292, %v41
    %v294 = vpop.permute.xlu0 %293
    %v296 = vrot.slane %v234, 2
    %v297 = vrot.slane %v235, 1
    %v298 = vsel %vm64, %v297, %v296
    %v299 = vsel %vm67, %v236, %v298
    %v300 = vrot.slane %v237, 7
    %v301 = vsel %vm70, %v300, %v299
    %v302 = vrot.slane %v238, 6
    %v303 = vsel %vm73, %v302, %v301
    %v304 = vrot.slane %v239, 5
    %v305 = vsel %vm76, %v304, %v303
    %v306 = vrot.slane %v240, 4
    %v307 = vsel %vm79, %v306, %v305
    %v308 = vrot.slane %v241, 3
    %v309 = vsel %vm82, %v308, %v307
    %v311 = vmul.f32 %v294, %v309
    %v312 = vadd.f32 %v291, %v311
    %313 = vset.pattern.permute.xlu0 11
    %314 = vperm.xlu0 %313, %v41
    %v315 = vpop.permute.xlu0 %314
    %v317 = vrot.slane %v234, 3
    %v318 = vrot.slane %v235, 2
    %v319 = vsel %vm64, %v318, %v317
    %v320 = vrot.slane %v236, 1
    %v321 = vsel %vm67, %v320, %v319
    %v322 = vsel %vm70, %v237, %v321
    %v323 = vrot.slane %v238, 7
    %v324 = vsel %vm73, %v323, %v322
    %v325 = vrot.slane %v239, 6
    %v326 = vsel %vm76, %v325, %v324
    %v327 = vrot.slane %v240, 5
    %v328 = vsel %vm79, %v327, %v326
    %v329 = vrot.slane %v241, 4
    %v330 = vsel %vm82, %v329, %v328
    %v332 = vmul.f32 %v315, %v330
    %v333 = vadd.f32 %v312, %v332
    %334 = vset.pattern.permute.xlu0 12
    %335 = vperm.xlu0 %334, %v41
    %v336 = vpop.permute.xlu0 %335
    %v338 = vrot.slane %v234, 4
    %v339 = vrot.slane %v235, 3
    %v340 = vsel %vm64, %v339, %v338
    %v341 = vrot.slane %v236, 2
    %v342 = vsel %vm67, %v341, %v340
    %v343 = vrot.slane %v237, 1
    %v344 = vsel %vm70, %v343, %v342
    %v345 = vsel %vm73, %v238, %v344
    %v346 = vrot.slane %v239, 7
    %v347 = vsel %vm76, %v346, %v345
    %v348 = vrot.slane %v240, 6
    %v349 = vsel %vm79, %v348, %v347
    %v350 = vrot.slane %v241, 5
    %v351 = vsel %vm82, %v350, %v349
    %v353 = vmul.f32 %v336, %v351
    %v354 = vadd.f32 %v333, %v353
    %355 = vset.pattern.permute.xlu0 13
    %356 = vperm.xlu0 %355, %v41
    %v357 = vpop.permute.xlu0 %356
    %v359 = vrot.slane %v234, 5
    %v360 = vrot.slane %v235, 4
    %v361 = vsel %vm64, %v360, %v359
    %v362 = vrot.slane %v236, 3
    %v363 = vsel %vm67, %v362, %v361
    %v364 = vrot.slane %v237, 2
    %v365 = vsel %vm70, %v364, %v363
    %v366 = vrot.slane %v238, 1
    %v367 = vsel %vm73, %v366, %v365
    %v368 = vsel %vm76, %v239, %v367
    %v369 = vrot.slane %v240, 7
    %v370 = vsel %vm79, %v369, %v368
    %v371 = vrot.slane %v241, 6
    %v372 = vsel %vm82, %v371, %v370
    %v374 = vmul.f32 %v357, %v372
    %v375 = vadd.f32 %v354, %v374
    %376 = vset.pattern.permute.xlu0 14
    %377 = vperm.xlu0 %376, %v41
    %v378 = vpop.permute.xlu0 %377
    %v380 = vrot.slane %v234, 6
    %v381 = vrot.slane %v235, 5
    %v382 = vsel %vm64, %v381, %v380
    %v383 = vrot.slane %v236, 4
    %v384 = vsel %vm67, %v383, %v382
    %v385 = vrot.slane %v237, 3
    %v386 = vsel %vm70, %v385, %v384
    %v387 = vrot.slane %v238, 2
    %v388 = vsel %vm73, %v387, %v386
    %v389 = vrot.slane %v239, 1
    %v390 = vsel %vm76, %v389, %v388
    %v391 = vsel %vm79, %v240, %v390
    %v392 = vrot.slane %v241, 7
    %v393 = vsel %vm82, %v392, %v391
    %v395 = vmul.f32 %v378, %v393
    %v396 = vadd.f32 %v375, %v395
    %397 = vset.pattern.permute.xlu0 15
    %398 = vperm.xlu0 %397, %v41
    %v399 = vpop.permute.xlu0 %398
    %v401 = vrot.slane %v234, 7
    %v402 = vrot.slane %v235, 6
    %v403 = vsel %vm64, %v402, %v401
    %v404 = vrot.slane %v236, 5
    %v405 = vsel %vm67, %v404, %v403
    %v406 = vrot.slane %v237, 4
    %v407 = vsel %vm70, %v406, %v405
    %v408 = vrot.slane %v238, 3
    %v409 = vsel %vm73, %v408, %v407
    %v410 = vrot.slane %v239, 2
    %v411 = vsel %vm76, %v410, %v409
    %v412 = vrot.slane %v240, 1
    %v413 = vsel %vm79, %v412, %v411
    %v414 = vsel %vm82, %v241, %v413
    %v416 = vmul.f32 %v399, %v414
    %v417 = vadd.f32 %v396, %v416
    %v418 = vld [vmem:[#allocation5 + $0x10] sm:$0xff]
    %v419 = vld [vmem:[#allocation5 + $0x30] sm:$0xff]
    %v420 = vld [vmem:[#allocation5 + $0x50] sm:$0xff]
    %v421 = vld [vmem:[#allocation5 + $0x70] sm:$0xff]
    %v422 = vld [vmem:[#allocation5 + $0x90] sm:$0xff]
    %v423 = vld [vmem:[#allocation5 + $0xb0] sm:$0xff]
    %v424 = vld [vmem:[#allocation5 + $0xd0] sm:$0xff]
    %v425 = vld [vmem:[#allocation5 + $0xf0] sm:$0xff]
    %426 = vset.pattern.permute.xlu0 16
    %427 = vperm.xlu0 %426, %v41
    %v428 = vpop.permute.xlu0 %427
    %v438 = vrot.slane %v419, 7
    %v439 = vsel %vm64, %v438, %v418
    %v440 = vrot.slane %v420, 6
    %v441 = vsel %vm67, %v440, %v439
    %v442 = vrot.slane %v421, 5
    %v443 = vsel %vm70, %v442, %v441
    %v444 = vrot.slane %v422, 4
    %v445 = vsel %vm73, %v444, %v443
    %v446 = vrot.slane %v423, 3
    %v447 = vsel %vm76, %v446, %v445
    %v448 = vrot.slane %v424, 2
    %v449 = vsel %vm79, %v448, %v447
    %v450 = vrot.slane %v425, 1
    %v451 = vsel %vm82, %v450, %v449
    %v453 = vmul.f32 %v428, %v451
    %v454 = vadd.f32 %v417, %v453
    %455 = vset.pattern.permute.xlu0 17
    %456 = vperm.xlu0 %455, %v41
    %v457 = vpop.permute.xlu0 %456
    %v459 = vrot.slane %v418, 1
    %v460 = vsel %vm64, %v419, %v459
    %v461 = vrot.slane %v420, 7
    %v462 = vsel %vm67, %v461, %v460
    %v463 = vrot.slane %v421, 6
    %v464 = vsel %vm70, %v463, %v462
    %v465 = vrot.slane %v422, 5
    %v466 = vsel %vm73, %v465, %v464
    %v467 = vrot.slane %v423, 4
    %v468 = vsel %vm76, %v467, %v466
    %v469 = vrot.slane %v424, 3
    %v470 = vsel %vm79, %v469, %v468
    %v471 = vrot.slane %v425, 2
    %v472 = vsel %vm82, %v471, %v470
    %v474 = vmul.f32 %v457, %v472
    %v475 = vadd.f32 %v454, %v474
    %476 = vset.pattern.permute.xlu0 18
    %477 = vperm.xlu0 %476, %v41
    %v478 = vpop.permute.xlu0 %477
    %v480 = vrot.slane %v418, 2
    %v481 = vrot.slane %v419, 1
    %v482 = vsel %vm64, %v481, %v480
    %v483 = vsel %vm67, %v420, %v482
    %v484 = vrot.slane %v421, 7
    %v485 = vsel %vm70, %v484, %v483
    %v486 = vrot.slane %v422, 6
    %v487 = vsel %vm73, %v486, %v485
    %v488 = vrot.slane %v423, 5
    %v489 = vsel %vm76, %v488, %v487
    %v490 = vrot.slane %v424, 4
    %v491 = vsel %vm79, %v490, %v489
    %v492 = vrot.slane %v425, 3
    %v493 = vsel %vm82, %v492, %v491
    %v495 = vmul.f32 %v478, %v493
    %v496 = vadd.f32 %v475, %v495
    %497 = vset.pattern.permute.xlu0 19
    %498 = vperm.xlu0 %497, %v41
    %v499 = vpop.permute.xlu0 %498
    %v501 = vrot.slane %v418, 3
    %v502 = vrot.slane %v419, 2
    %v503 = vsel %vm64, %v502, %v501
    %v504 = vrot.slane %v420, 1
    %v505 = vsel %vm67, %v504, %v503
    %v506 = vsel %vm70, %v421, %v505
    %v507 = vrot.slane %v422, 7
    %v508 = vsel %vm73, %v507, %v506
    %v509 = vrot.slane %v423, 6
    %v510 = vsel %vm76, %v509, %v508
    %v511 = vrot.slane %v424, 5
    %v512 = vsel %vm79, %v511, %v510
    %v513 = vrot.slane %v425, 4
    %v514 = vsel %vm82, %v513, %v512
    %v516 = vmul.f32 %v499, %v514
    %v517 = vadd.f32 %v496, %v516
    %518 = vset.pattern.permute.xlu0 20
    %519 = vperm.xlu0 %518, %v41
    %v520 = vpop.permute.xlu0 %519
    %v522 = vrot.slane %v418, 4
    %v523 = vrot.slane %v419, 3
    %v524 = vsel %vm64, %v523, %v522
    %v525 = vrot.slane %v420, 2
    %v526 = vsel %vm67, %v525, %v524
    %v527 = vrot.slane %v421, 1
    %v528 = vsel %vm70, %v527, %v526
    %v529 = vsel %vm73, %v422, %v528
    %v530 = vrot.slane %v423, 7
    %v531 = vsel %vm76, %v530, %v529
    %v532 = vrot.slane %v424, 6
    %v533 = vsel %vm79, %v532, %v531
    %v534 = vrot.slane %v425, 5
    %v535 = vsel %vm82, %v534, %v533
    %v537 = vmul.f32 %v520, %v535
    %v538 = vadd.f32 %v517, %v537
    %539 = vset.pattern.permute.xlu0 21
    %540 = vperm.xlu0 %539, %v41
    %v541 = vpop.permute.xlu0 %540
    %v543 = vrot.slane %v418, 5
    %v544 = vrot.slane %v419, 4
    %v545 = vsel %vm64, %v544, %v543
    %v546 = vrot.slane %v420, 3
    %v547 = vsel %vm67, %v546, %v545
    %v548 = vrot.slane %v421, 2
    %v549 = vsel %vm70, %v548, %v547
    %v550 = vrot.slane %v422, 1
    %v551 = vsel %vm73, %v550, %v549
    %v552 = vsel %vm76, %v423, %v551
    %v553 = vrot.slane %v424, 7
    %v554 = vsel %vm79, %v553, %v552
    %v555 = vrot.slane %v425, 6
    %v556 = vsel %vm82, %v555, %v554
    %v558 = vmul.f32 %v541, %v556
    %v559 = vadd.f32 %v538, %v558
    %560 = vset.pattern.permute.xlu0 22
    %561 = vperm.xlu0 %560, %v41
    %v562 = vpop.permute.xlu0 %561
    %v564 = vrot.slane %v418, 6
    %v565 = vrot.slane %v419, 5
    %v566 = vsel %vm64, %v565, %v564
    %v567 = vrot.slane %v420, 4
    %v568 = vsel %vm67, %v567, %v566
    %v569 = vrot.slane %v421, 3
    %v570 = vsel %vm70, %v569, %v568
    %v571 = vrot.slane %v422, 2
    %v572 = vsel %vm73, %v571, %v570
    %v573 = vrot.slane %v423, 1
    %v574 = vsel %vm76, %v573, %v572
    %v575 = vsel %vm79, %v424, %v574
    %v576 = vrot.slane %v425, 7
    %v577 = vsel %vm82, %v576, %v575
    %v579 = vmul.f32 %v562, %v577
    %v580 = vadd.f32 %v559, %v579
    %581 = vset.pattern.permute.xlu0 23
    %582 = vperm.xlu0 %581, %v41
    %v583 = vpop.permute.xlu0 %582
    %v585 = vrot.slane %v418, 7
    %v586 = vrot.slane %v419, 6
    %v587 = vsel %vm64, %v586, %v585
    %v588 = vrot.slane %v420, 5
    %v589 = vsel %vm67, %v588, %v587
    %v590 = vrot.slane %v421, 4
    %v591 = vsel %vm70, %v590, %v589
    %v592 = vrot.slane %v422, 3
    %v593 = vsel %vm73, %v592, %v591
    %v594 = vrot.slane %v423, 2
    %v595 = vsel %vm76, %v594, %v593
    %v596 = vrot.slane %v424, 1
    %v597 = vsel %vm79, %v596, %v595
    %v598 = vsel %vm82, %v425, %v597
    %v600 = vmul.f32 %v583, %v598
    %v601 = vadd.f32 %v580, %v600
    %v602 = vld [vmem:[#allocation5 + $0x18] sm:$0xff]
    %v603 = vld [vmem:[#allocation5 + $0x38] sm:$0xff]
    %v604 = vld [vmem:[#allocation5 + $0x58] sm:$0xff]
    %v605 = vld [vmem:[#allocation5 + $0x78] sm:$0xff]
    %v606 = vld [vmem:[#allocation5 + $0x98] sm:$0xff]
    %v607 = vld [vmem:[#allocation5 + $0xb8] sm:$0xff]
    %v608 = vld [vmem:[#allocation5 + $0xd8] sm:$0xff]
    %v609 = vld [vmem:[#allocation5 + $0xf8] sm:$0xff]
    %610 = vset.pattern.permute.xlu0 24
    %611 = vperm.xlu0 %610, %v41
    %v612 = vpop.permute.xlu0 %611
    %v622 = vrot.slane %v603, 7
    %v623 = vsel %vm64, %v622, %v602
    %v624 = vrot.slane %v604, 6
    %v625 = vsel %vm67, %v624, %v623
    %v626 = vrot.slane %v605, 5
    %v627 = vsel %vm70, %v626, %v625
    %v628 = vrot.slane %v606, 4
    %v629 = vsel %vm73, %v628, %v627
    %v630 = vrot.slane %v607, 3
    %v631 = vsel %vm76, %v630, %v629
    %v632 = vrot.slane %v608, 2
    %v633 = vsel %vm79, %v632, %v631
    %v634 = vrot.slane %v609, 1
    %v635 = vsel %vm82, %v634, %v633
    %v637 = vmul.f32 %v612, %v635
    %v638 = vadd.f32 %v601, %v637
    %639 = vset.pattern.permute.xlu0 25
    %640 = vperm.xlu0 %639, %v41
    %v641 = vpop.permute.xlu0 %640
    %v643 = vrot.slane %v602, 1
    %v644 = vsel %vm64, %v603, %v643
    %v645 = vrot.slane %v604, 7
    %v646 = vsel %vm67, %v645, %v644
    %v647 = vrot.slane %v605, 6
    %v648 = vsel %vm70, %v647, %v646
    %v649 = vrot.slane %v606, 5
    %v650 = vsel %vm73, %v649, %v648
    %v651 = vrot.slane %v607, 4
    %v652 = vsel %vm76, %v651, %v650
    %v653 = vrot.slane %v608, 3
    %v654 = vsel %vm79, %v653, %v652
    %v655 = vrot.slane %v609, 2
    %v656 = vsel %vm82, %v655, %v654
    %v658 = vmul.f32 %v641, %v656
    %v659 = vadd.f32 %v638, %v658
    %660 = vset.pattern.permute.xlu0 26
    %661 = vperm.xlu0 %660, %v41
    %v662 = vpop.permute.xlu0 %661
    %v664 = vrot.slane %v602, 2
    %v665 = vrot.slane %v603, 1
    %v666 = vsel %vm64, %v665, %v664
    %v667 = vsel %vm67, %v604, %v666
    %v668 = vrot.slane %v605, 7
    %v669 = vsel %vm70, %v668, %v667
    %v670 = vrot.slane %v606, 6
    %v671 = vsel %vm73, %v670, %v669
    %v672 = vrot.slane %v607, 5
    %v673 = vsel %vm76, %v672, %v671
    %v674 = vrot.slane %v608, 4
    %v675 = vsel %vm79, %v674, %v673
    %v676 = vrot.slane %v609, 3
    %v677 = vsel %vm82, %v676, %v675
    %v679 = vmul.f32 %v662, %v677
    %v680 = vadd.f32 %v659, %v679
    %681 = vset.pattern.permute.xlu0 27
    %682 = vperm.xlu0 %681, %v41
    %v683 = vpop.permute.xlu0 %682
    %v685 = vrot.slane %v602, 3
    %v686 = vrot.slane %v603, 2
    %v687 = vsel %vm64, %v686, %v685
    %v688 = vrot.slane %v604, 1
    %v689 = vsel %vm67, %v688, %v687
    %v690 = vsel %vm70, %v605, %v689
    %v691 = vrot.slane %v606, 7
    %v692 = vsel %vm73, %v691, %v690
    %v693 = vrot.slane %v607, 6
    %v694 = vsel %vm76, %v693, %v692
    %v695 = vrot.slane %v608, 5
    %v696 = vsel %vm79, %v695, %v694
    %v697 = vrot.slane %v609, 4
    %v698 = vsel %vm82, %v697, %v696
    %v700 = vmul.f32 %v683, %v698
    %v701 = vadd.f32 %v680, %v700
    %702 = vset.pattern.permute.xlu0 28
    %703 = vperm.xlu0 %702, %v41
    %v704 = vpop.permute.xlu0 %703
    %v706 = vrot.slane %v602, 4
    %v707 = vrot.slane %v603, 3
    %v708 = vsel %vm64, %v707, %v706
    %v709 = vrot.slane %v604, 2
    %v710 = vsel %vm67, %v709, %v708
    %v711 = vrot.slane %v605, 1
    %v712 = vsel %vm70, %v711, %v710
    %v713 = vsel %vm73, %v606, %v712
    %v714 = vrot.slane %v607, 7
    %v715 = vsel %vm76, %v714, %v713
    %v716 = vrot.slane %v608, 6
    %v717 = vsel %vm79, %v716, %v715
    %v718 = vrot.slane %v609, 5
    %v719 = vsel %vm82, %v718, %v717
    %v721 = vmul.f32 %v704, %v719
    %v722 = vadd.f32 %v701, %v721
    %723 = vset.pattern.permute.xlu0 29
    %724 = vperm.xlu0 %723, %v41
    %v725 = vpop.permute.xlu0 %724
    %v727 = vrot.slane %v602, 5
    %v728 = vrot.slane %v603, 4
    %v729 = vsel %vm64, %v728, %v727
    %v730 = vrot.slane %v604, 3
    %v731 = vsel %vm67, %v730, %v729
    %v732 = vrot.slane %v605, 2
    %v733 = vsel %vm70, %v732, %v731
    %v734 = vrot.slane %v606, 1
    %v735 = vsel %vm73, %v734, %v733
    %v736 = vsel %vm76, %v607, %v735
    %v737 = vrot.slane %v608, 7
    %v738 = vsel %vm79, %v737, %v736
    %v739 = vrot.slane %v609, 6
    %v740 = vsel %vm82, %v739, %v738
    %v742 = vmul.f32 %v725, %v740
    %v743 = vadd.f32 %v722, %v742
    %744 = vset.pattern.permute.xlu0 30
    %745 = vperm.xlu0 %744, %v41
    %v746 = vpop.permute.xlu0 %745
    %v748 = vrot.slane %v602, 6
    %v749 = vrot.slane %v603, 5
    %v750 = vsel %vm64, %v749, %v748
    %v751 = vrot.slane %v604, 4
    %v752 = vsel %vm67, %v751, %v750
    %v753 = vrot.slane %v605, 3
    %v754 = vsel %vm70, %v753, %v752
    %v755 = vrot.slane %v606, 2
    %v756 = vsel %vm73, %v755, %v754
    %v757 = vrot.slane %v607, 1
    %v758 = vsel %vm76, %v757, %v756
    %v759 = vsel %vm79, %v608, %v758
    %v760 = vrot.slane %v609, 7
    %v761 = vsel %vm82, %v760, %v759
    %v763 = vmul.f32 %v746, %v761
    %v764 = vadd.f32 %v743, %v763
    %765 = vset.pattern.permute.xlu0 31
    %766 = vperm.xlu0 %765, %v41
    %v767 = vpop.permute.xlu0 %766
    %v769 = vrot.slane %v602, 7
    %v770 = vrot.slane %v603, 6
    %v771 = vsel %vm64, %v770, %v769
    %v772 = vrot.slane %v604, 5
    %v773 = vsel %vm67, %v772, %v771
    %v774 = vrot.slane %v605, 4
    %v775 = vsel %vm70, %v774, %v773
    %v776 = vrot.slane %v606, 3
    %v777 = vsel %vm73, %v776, %v775
    %v778 = vrot.slane %v607, 2
    %v779 = vsel %vm76, %v778, %v777
    %v780 = vrot.slane %v608, 1
    %v781 = vsel %vm79, %v780, %v779
    %v782 = vsel %vm82, %v609, %v781
    %v784 = vmul.f32 %v767, %v782
    %v785 = vadd.f32 %v764, %v784
    %v786 = vmul.f32 %v785, 0.17677669
    %v787 = vlaneseq
    %v788 = vand.u32 %v787, 127
    %vm789 = vcmp.lt.s32.totalorder %v788, 8
    %v790 = vsel %vm789, %v786, -1e+30
    %791 = vmax.xlane.f32.xlu0 %v790
    %v792 = vpop.xlane.xlu0 %791
    %v793 = vsub.f32 %v790, %v792
    %v794 = vmul.f32 %v793, 1.442695
    %v795 = vpow.pop %v794
    %796 = vadd.xlane.f32.xlu0 %v795
    %v797 = vpop.xlane.xlu0 %796
    %v798 = vrcp.pop %v797
    %v799 = vmul.f32 %v797, %v798
    %v800 = vsub.f32 2.0, %v799
    %v801 = vmul.f32 %v798, %v800
    %v802 = vmul.f32 %v795, %v801
    %v803 = vld [vmem:[%s2] sm:$0x1]
    %v805 = vlaneseq
    %v806 = vshrl.u32 %v805, 7
    %v807 = vsub.s32 0, %v806
    %v808 = vrot.slane %v803, %v807
    %v810 = vadd.f32 %v802, %v808
    %811 = vst [vmem:[#allocation7] sm:$0xff] %v810
    // Predicated region
    $region22: #{tpu_custom_call.1} parent=1 // pred_check
      _
    $region23: #{tpu_custom_call.1} parent=1 // pred_check_branch
      %813 = sbr.rel (0) target = $region25
    $region24: #{tpu_custom_call.1} parent=1 // pred_region
      %s815 = ssub.s32 128, 128
      %816 = vsyncadd [#allocation4], %s815
      %s818 = sshll.u32 [#allocation7], 4
      %s819 = int_to_ptr.vmem [resolvable:$true] %s818
      %821 = dma.vmem_to_hbm [thread:$0]  %s819, 128, %s3, [#allocation4]
    $region25: #{tpu_custom_call.1} parent=1 // pred_fallthru
      _
    // Predicated region
    $region26: #{tpu_custom_call.1} parent=1 // pred_check
      _
    $region27: #{tpu_custom_call.1} parent=1 // pred_check_branch
      %823 = sbr.rel (0) target = $region29
    $region28: #{tpu_custom_call.1} parent=1 // pred_region
      %824 = dma.done [#allocation4], 128
    $region29: #{tpu_custom_call.1} parent=1 // pred_fallthru
      _
    %825 = vsyncpa [#allocation3], 1
    %826 = vsyncpa [#allocation6], 1
    %827 = vsyncpa [#allocation4], 1

</llo_original>
